<compile_context>
chip_gen: v7x
topology: tpu7x:2x2x1
jax: 0.10.0
libtpu: 0.0.40
codegen_flags: <defaults>
</compile_context>

<pallas_src>
import functools

import jax
import jax.numpy as jnp
from jax.experimental import pallas as pl
from jax.experimental.pallas import tpu as pltpu


TN_MAX = 8192          # max lane width of one tile (columns)
TM_MAX = 1024          # max sublane height of one tile (rows)
X_TILE_BYTES = 4 * 1024 * 1024   # target f32 bytes for one X tile


def _round_up(x, m):
    return ((x + m - 1) // m) * m


def _select_tiles(N):
    """Pick (tm, tn): tn spans the whole (128-aligned) row when possible,
    tm is the largest multiple of 8 keeping the tile under X_TILE_BYTES."""
    n_cols_full = _round_up(N, 128)
    n_rows_full = _round_up(N, 8)
    tn = min(n_cols_full, TN_MAX)
    tm_budget = max(8, (X_TILE_BYTES // (tn * 4)) // 8 * 8)
    tm = min(n_rows_full, tm_budget, TM_MAX)
    return tm, tn


def _linemf_kernel(row_ref, col_ref, x_ref, o_ref):
    """out = log(max(X * row * col, 0.001)) on one (TM, TN) tile.

    row_ref: (TM, 1)  -> (vol_G / b) * inv_d[i]   (scalar scale folded in)
    col_ref: (1, TN)  -> inv_d[j]
    x_ref:   (TM, TN) -> X tile
    """
    z = x_ref[...] * row_ref[...] * col_ref[...]
    o_ref[...] = jnp.log(jnp.maximum(z, 0.001))


@functools.partial(jax.jit, static_argnames=("b",))
def linemf_forward(X, d_rt, b=5):
    """Pallas implementation of LINEMF.forward.

    X:    (N, N) float32 adjacency matrix.
    d_rt: (N,)   float32 node degrees (as set via set_d_rt); must be > 0,
          matching the torch module's 1/d_rt precondition.
    """
    N = X.shape[0]
    assert X.shape == (N, N)

    X = X.astype(jnp.float32)
    d_rt = d_rt.astype(jnp.float32)

    vol_G = jnp.sum(d_rt)
    inv_d = 1.0 / d_rt

    tm, tn = _select_tiles(N)

    # Pad to tile multiples (padded X entries are 0; padded degree factors are 1
    # so no inf/nan is ever produced; padding is sliced off at the end).
    n_rows = _round_up(N, tm)
    n_cols = _round_up(N, tn)

    if (n_rows, n_cols) != (N, N):
        Xp = jnp.zeros((n_rows, n_cols), jnp.float32).at[:N, :N].set(X)
    else:
        Xp = X

    row_factor = jnp.ones((n_rows,), jnp.float32).at[:N].set(inv_d * (vol_G / b))
    col_factor = jnp.ones((n_cols,), jnp.float32).at[:N].set(inv_d)
    row_factor = row_factor.reshape(n_rows, 1)
    col_factor = col_factor.reshape(1, n_cols)

    grid = (n_rows // tm, n_cols // tn)

    out = pl.pallas_call(
        _linemf_kernel,
        out_shape=jax.ShapeDtypeStruct((n_rows, n_cols), jnp.float32),
        grid=grid,
        in_specs=[
            pl.BlockSpec((tm, 1), lambda i, j: (i, 0)),
            pl.BlockSpec((1, tn), lambda i, j: (0, j)),
            pl.BlockSpec((tm, tn), lambda i, j: (i, j)),
        ],
        out_specs=pl.BlockSpec((tm, tn), lambda i, j: (i, j)),
        compiler_params=pltpu.CompilerParams(
            dimension_semantics=("parallel", "parallel"),
            vmem_limit_bytes=64 * 1024 * 1024,
        ),
        cost_estimate=pl.CostEstimate(
            flops=3 * n_rows * n_cols,                # 2 muls + 1 max per element
            transcendentals=n_rows * n_cols,          # 1 log per element
            bytes_accessed=2 * n_rows * n_cols * 4,   # read X + write out (f32)
        ),
    )(row_factor, col_factor, Xp)

    if (n_rows, n_cols) != (N, N):
        out = out[:N, :N]
    return out


def _reference(X, d_rt, b=5):
    X = X.astype(jnp.float32)
    d_rt = d_rt.astype(jnp.float32)
    vol_G = jnp.sum(d_rt)
    D_inv = jnp.diag(1.0 / d_rt)
    Xs = X * (vol_G / b)
    Z = D_inv @ (Xs @ D_inv)
    return jnp.log(jnp.maximum(Z, 0.001))


if __name__ == "__main__":
    key = jax.random.PRNGKey(0)
    N = 256  # number of graph nodes (small demo size)

    # Deterministic synthetic symmetric adjacency matrix with positive degrees.
    U = jax.random.uniform(key, (N, N))
    A = (U > 0.5).astype(jnp.float32)
    A = jnp.maximum(A, A.T)
    A = A.at[jnp.arange(N), jnp.arange(N)].set(1.0)  # self-loops => degree > 0
    d_rt = jnp.sum(A, axis=1)  # degrees, as passed to set_d_rt

    out = linemf_forward(A, d_rt, b=5)
    out = jax.block_until_ready(out)

    ref = _reference(A, d_rt, b=5)
    assert out.shape == (N, N) and out.dtype == jnp.float32
    assert jnp.allclose(out, ref, rtol=1e-5, atol=1e-5), "mismatch vs. reference"

    # Also exercise a ragged (non-tile-aligned) size to check the padding path.
    N2 = 200
    A2 = A[:N2, :N2]
    A2 = A2.at[jnp.arange(N2), jnp.arange(N2)].set(1.0)
    d2 = jnp.sum(A2, axis=1)
    out2 = jax.block_until_ready(linemf_forward(A2, d2, b=5))
    assert jnp.allclose(out2, _reference(A2, d2, b=5), rtol=1e-5, atol=1e-5)

    print("KERNEL_OK")
</pallas_src>

<mosaic_0001>
module attributes {stable_mosaic.version = 11 : i64} {
  func.func @_linemf_kernel(%arg0: i32, %arg1: i32, %arg2: memref<256x1xf32, #tpu.memory_space<vmem>>, %arg3: memref<1x256xf32, #tpu.memory_space<vmem>>, %arg4: memref<256x256xf32, #tpu.memory_space<vmem>>, %arg5: memref<256x256xf32, #tpu.memory_space<vmem>>) attributes {dimension_semantics = [#tpu.dimension_semantics<parallel>, #tpu.dimension_semantics<parallel>], iteration_bounds = array<i64: 1, 1>, scalar_prefetch = 0 : i64, scratch_operands = 0 : i64, tpu.core_type = #tpu.core_type<tc>, window_params = [{transform_indices = @transform_0, window_bounds = array<i64: 256, 1>}, {transform_indices = @transform_1, window_bounds = array<i64: 1, 256>}, {transform_indices = @transform_2, window_bounds = array<i64: 256, 256>}, {transform_indices = @transform_3, window_bounds = array<i64: 256, 256>}]} {
    %c0 = arith.constant 0 : index
    %c0_0 = arith.constant 0 : index
    %0 = vector.load %arg4[%c0, %c0_0] : memref<256x256xf32, #tpu.memory_space<vmem>>, vector<256x256xf32>
    %c0_1 = arith.constant 0 : index
    %c0_2 = arith.constant 0 : index
    %1 = vector.load %arg2[%c0_1, %c0_2] : memref<256x1xf32, #tpu.memory_space<vmem>>, vector<256x1xf32>
    %2 = vector.broadcast %1 : vector<256x1xf32> to vector<256x256xf32>
    %3 = arith.mulf %0, %2 : vector<256x256xf32>
    %c0_3 = arith.constant 0 : index
    %c0_4 = arith.constant 0 : index
    %4 = vector.load %arg3[%c0_3, %c0_4] : memref<1x256xf32, #tpu.memory_space<vmem>>, vector<1x256xf32>
    %5 = vector.broadcast %4 : vector<1x256xf32> to vector<256x256xf32>
    %6 = arith.mulf %3, %5 : vector<256x256xf32>
    %cst = arith.constant 1.000000e-03 : f32
    %7 = vector.broadcast %cst : f32 to vector<256x256xf32>
    %8 = arith.maximumf %6, %7 : vector<256x256xf32>
    %9 = math.log %8 : vector<256x256xf32>
    %c0_5 = arith.constant 0 : index
    %c0_6 = arith.constant 0 : index
    %10 = vector.load %arg5[%c0_5, %c0_6] : memref<256x256xf32, #tpu.memory_space<vmem>>, vector<256x256xf32>
    tpu.vector_store %arg5[%c0_5, %c0_6], %9 {strides = array<i32>} : memref<256x256xf32, #tpu.memory_space<vmem>>, vector<256x256xf32>,
    return
  }
  func.func @transform_0(%arg0: i32, %arg1: i32) -> (i32, i32) {
    %c0_i32 = arith.constant 0 : i32
    %c0_i32_0 = arith.constant 0 : i32
    return %arg0, %c0_i32 : i32, i32
  }
  func.func @transform_1(%arg0: i32, %arg1: i32) -> (i32, i32) {
    %c0_i32 = arith.constant 0 : i32
    %c0_i32_0 = arith.constant 0 : i32
    return %c0_i32, %arg1 : i32, i32
  }
  func.func @transform_2(%arg0: i32, %arg1: i32) -> (i32, i32) {
    %c0_i32 = arith.constant 0 : i32
    return %arg0, %arg1 : i32, i32
  }
  func.func @transform_3(%arg0: i32, %arg1: i32) -> (i32, i32) {
    %c0_i32 = arith.constant 0 : i32
    return %arg0, %arg1 : i32, i32
  }
}

</mosaic_0001>

<llo_original>
// kernel: linemf_forward.1
$region0: #{linemf_forward.1}
  #allocation0 [shape = 'u32[]', space=smem, size = 0x4, offset = 0x4, fixed_abs, tag = 'smem constant byte address 0x4 - core index']
  #allocation1 [shape = 'u32[144,128]{1,0:T(1,128)}', space=vmem, size = 0x12000, scoped, tag = 'internal scratch']
  %s0 = inlined_call_operand.hbm [shape: f32[256,1], index: 0, kind: input, shape index: {}]
  %s1 = inlined_call_operand.hbm [shape: f32[1,256], index: 1, kind: input, shape index: {}]
  %s2 = inlined_call_operand.hbm [shape: f32[256,256], index: 2, kind: input, shape index: {}]
  %s3 = inlined_call_operand.hbm [shape: f32[256,256], index: 3, kind: output, shape index: {}]
  %s4 = sld [smem:[#allocation0]]
  $region34: #{linemf_forward.1} parent=0
    _
  %s6 = ssub.s32 1, %s4
  %s7 = scalar_select 0, %s6, %s4
  $region1: #{linemf_forward.1} parent=0
    #allocation2 [shape = 'u8[131072]{0}', space=vmem, size = 0x20000, scoped, tag = 'input window, operand 0, single buffered']
    #allocation3 [shape = 's32[1]{0}', space=sflag, size = 0x4, scoped, tag = 'scoped memory for linemf_forward.1']
    #allocation4 [shape = 's32[1]{0}', space=sflag, size = 0x4, scoped, tag = 'scoped memory for linemf_forward.1']
    #allocation5 [shape = 'u8[1024]{0}', space=vmem, size = 0x400, scoped, tag = 'input window, operand 1, single buffered']
    #allocation6 [shape = 's32[1]{0}', space=sflag, size = 0x4, scoped, tag = 'scoped memory for linemf_forward.1']
    #allocation7 [shape = 'u8[262144]{0}', space=vmem, size = 0x40000, scoped, tag = 'input window, operand 2, single buffered']
    #allocation8 [shape = 'u8[262144]{0}', space=vmem, size = 0x40000, scoped, tag = 'output window, operand 0, single buffered']
    %8 = vsyncpa [#allocation3], 0
    %9 = vsyncpa [#allocation6], 0
    %10 = vsyncpa [#allocation4], 0
    // Predicated region
    $region2: #{linemf_forward.1} parent=1 // pred_check
      _
    $region3: #{linemf_forward.1} parent=1 // pred_check_branch
      %12 = sbr.rel (0) target = $region5
    $region4: #{linemf_forward.1} parent=1 // pred_region
      %s14 = ssub.s32 4096, 4096
      %15 = vsyncadd [#allocation3], %s14
      %s16 = sshll.u32 [#allocation2], 4
      %s17 = int_to_ptr.vmem [resolvable:$true] %s16
      %22 = dma.hbm_to_vmem [thread:$0]  %s0, 4096, %s17, [#allocation3], 128, 128, 8
    $region5: #{linemf_forward.1} parent=1 // pred_fallthru
      _
    // Predicated region
    $region6: #{linemf_forward.1} parent=1 // pred_check
      _
    $region7: #{linemf_forward.1} parent=1 // pred_check_branch
      %24 = sbr.rel (0) target = $region9
    $region8: #{linemf_forward.1} parent=1 // pred_region
      %s26 = ssub.s32 32, 32
      %27 = vsyncadd [#allocation6], %s26
      %s29 = sshll.u32 [#allocation5], 4
      %s30 = int_to_ptr.vmem [resolvable:$true] %s29
      %32 = dma.hbm_to_vmem [thread:$0]  %s1, 32, %s30, [#allocation6]
    $region9: #{linemf_forward.1} parent=1 // pred_fallthru
      _
    // Predicated region
    $region10: #{linemf_forward.1} parent=1 // pred_check
      _
    $region11: #{linemf_forward.1} parent=1 // pred_check_branch
      %34 = sbr.rel (0) target = $region13
    $region12: #{linemf_forward.1} parent=1 // pred_region
      %s36 = ssub.s32 8192, 8192
      %37 = vsyncadd [#allocation6], %s36
      %s38 = sshll.u32 [#allocation7], 4
      %s39 = int_to_ptr.vmem [resolvable:$true] %s38
      %44 = dma.hbm_to_vmem [thread:$0]  %s2, 8192, %s39, [#allocation6], 256, 256, 16
    $region13: #{linemf_forward.1} parent=1 // pred_fallthru
      _
    // Predicated region
    $region14: #{linemf_forward.1} parent=1 // pred_check
      _
    $region15: #{linemf_forward.1} parent=1 // pred_check_branch
      %46 = sbr.rel (0) target = $region17
    $region16: #{linemf_forward.1} parent=1 // pred_region
      %47 = dma.done [#allocation3], 4096
    $region17: #{linemf_forward.1} parent=1 // pred_fallthru
      _
    // Predicated region
    $region18: #{linemf_forward.1} parent=1 // pred_check
      _
    $region19: #{linemf_forward.1} parent=1 // pred_check_branch
      %49 = sbr.rel (0) target = $region21
    $region20: #{linemf_forward.1} parent=1 // pred_region
      %50 = dma.done [#allocation6], 32
    $region21: #{linemf_forward.1} parent=1 // pred_fallthru
      _
    // Predicated region
    $region22: #{linemf_forward.1} parent=1 // pred_check
      _
    $region23: #{linemf_forward.1} parent=1 // pred_check_branch
      %52 = sbr.rel (0) target = $region25
    $region24: #{linemf_forward.1} parent=1 // pred_region
      %53 = dma.done [#allocation6], 8192
    $region25: #{linemf_forward.1} parent=1 // pred_fallthru
      _
    %v54 = vld [vmem:[#allocation7] sm:$0xff]
    %v55 = vld [vmem:[#allocation7 + $0x8] sm:$0xff]
    %v56 = vld [vmem:[#allocation7 + $0x10] sm:$0xff]
    %v57 = vld [vmem:[#allocation7 + $0x18] sm:$0xff]
    %v58 = vld [vmem:[#allocation7 + $0x20] sm:$0xff]
    %v59 = vld [vmem:[#allocation7 + $0x28] sm:$0xff]
    %v60 = vld [vmem:[#allocation7 + $0x30] sm:$0xff]
    %v61 = vld [vmem:[#allocation7 + $0x38] sm:$0xff]
    %v62 = vld [vmem:[#allocation7 + $0x40] sm:$0xff]
    %v63 = vld [vmem:[#allocation7 + $0x48] sm:$0xff]
    %v64 = vld [vmem:[#allocation7 + $0x50] sm:$0xff]
    %v65 = vld [vmem:[#allocation7 + $0x58] sm:$0xff]
    %v66 = vld [vmem:[#allocation7 + $0x60] sm:$0xff]
    %v67 = vld [vmem:[#allocation7 + $0x68] sm:$0xff]
    %v68 = vld [vmem:[#allocation7 + $0x70] sm:$0xff]
    %v69 = vld [vmem:[#allocation7 + $0x78] sm:$0xff]
    %v70 = vld [vmem:[#allocation7 + $0x80] sm:$0xff]
    %v71 = vld [vmem:[#allocation7 + $0x88] sm:$0xff]
    %v72 = vld [vmem:[#allocation7 + $0x90] sm:$0xff]
    %v73 = vld [vmem:[#allocation7 + $0x98] sm:$0xff]
    %v74 = vld [vmem:[#allocation7 + $0xa0] sm:$0xff]
    %v75 = vld [vmem:[#allocation7 + $0xa8] sm:$0xff]
    %v76 = vld [vmem:[#allocation7 + $0xb0] sm:$0xff]
    %v77 = vld [vmem:[#allocation7 + $0xb8] sm:$0xff]
    %v78 = vld [vmem:[#allocation7 + $0xc0] sm:$0xff]
    %v79 = vld [vmem:[#allocation7 + $0xc8] sm:$0xff]
    %v80 = vld [vmem:[#allocation7 + $0xd0] sm:$0xff]
    %v81 = vld [vmem:[#allocation7 + $0xd8] sm:$0xff]
    %v82 = vld [vmem:[#allocation7 + $0xe0] sm:$0xff]
    %v83 = vld [vmem:[#allocation7 + $0xe8] sm:$0xff]
    %v84 = vld [vmem:[#allocation7 + $0xf0] sm:$0xff]
    %v85 = vld [vmem:[#allocation7 + $0xf8] sm:$0xff]
    %v86 = vld [vmem:[#allocation7 + $0x100] sm:$0xff]
    %v87 = vld [vmem:[#allocation7 + $0x108] sm:$0xff]
    %v88 = vld [vmem:[#allocation7 + $0x110] sm:$0xff]
    %v89 = vld [vmem:[#allocation7 + $0x118] sm:$0xff]
    %v90 = vld [vmem:[#allocation7 + $0x120] sm:$0xff]
    %v91 = vld [vmem:[#allocation7 + $0x128] sm:$0xff]
    %v92 = vld [vmem:[#allocation7 + $0x130] sm:$0xff]
    %v93 = vld [vmem:[#allocation7 + $0x138] sm:$0xff]
    %v94 = vld [vmem:[#allocation7 + $0x140] sm:$0xff]
    %v95 = vld [vmem:[#allocation7 + $0x148] sm:$0xff]
    %v96 = vld [vmem:[#allocation7 + $0x150] sm:$0xff]
    %v97 = vld [vmem:[#allocation7 + $0x158] sm:$0xff]
    %v98 = vld [vmem:[#allocation7 + $0x160] sm:$0xff]
    %v99 = vld [vmem:[#allocation7 + $0x168] sm:$0xff]
    %v100 = vld [vmem:[#allocation7 + $0x170] sm:$0xff]
    %v101 = vld [vmem:[#allocation7 + $0x178] sm:$0xff]
    %v102 = vld [vmem:[#allocation7 + $0x180] sm:$0xff]
    %v103 = vld [vmem:[#allocation7 + $0x188] sm:$0xff]
    %v104 = vld [vmem:[#allocation7 + $0x190] sm:$0xff]
    %v105 = vld [vmem:[#allocation7 + $0x198] sm:$0xff]
    %v106 = vld [vmem:[#allocation7 + $0x1a0] sm:$0xff]
    %v107 = vld [vmem:[#allocation7 + $0x1a8] sm:$0xff]
    %v108 = vld [vmem:[#allocation7 + $0x1b0] sm:$0xff]
    %v109 = vld [vmem:[#allocation7 + $0x1b8] sm:$0xff]
    %v110 = vld [vmem:[#allocation7 + $0x1c0] sm:$0xff]
    %v111 = vld [vmem:[#allocation7 + $0x1c8] sm:$0xff]
    %v112 = vld [vmem:[#allocation7 + $0x1d0] sm:$0xff]
    %v113 = vld [vmem:[#allocation7 + $0x1d8] sm:$0xff]
    %v114 = vld [vmem:[#allocation7 + $0x1e0] sm:$0xff]
    %v115 = vld [vmem:[#allocation7 + $0x1e8] sm:$0xff]
    %v116 = vld [vmem:[#allocation7 + $0x1f0] sm:$0xff]
    %v117 = vld [vmem:[#allocation7 + $0x1f8] sm:$0xff]
    %v118 = vld [vmem:[#allocation2] sm:$0xff]
    %v119 = vld [vmem:[#allocation2 + $0x8] sm:$0xff]
    %v120 = vld [vmem:[#allocation2 + $0x10] sm:$0xff]
    %v121 = vld [vmem:[#allocation2 + $0x18] sm:$0xff]
    %v122 = vld [vmem:[#allocation2 + $0x20] sm:$0xff]
    %v123 = vld [vmem:[#allocation2 + $0x28] sm:$0xff]
    %v124 = vld [vmem:[#allocation2 + $0x30] sm:$0xff]
    %v125 = vld [vmem:[#allocation2 + $0x38] sm:$0xff]
    %v126 = vld [vmem:[#allocation2 + $0x40] sm:$0xff]
    %v127 = vld [vmem:[#allocation2 + $0x48] sm:$0xff]
    %v128 = vld [vmem:[#allocation2 + $0x50] sm:$0xff]
    %v129 = vld [vmem:[#allocation2 + $0x58] sm:$0xff]
    %v130 = vld [vmem:[#allocation2 + $0x60] sm:$0xff]
    %v131 = vld [vmem:[#allocation2 + $0x68] sm:$0xff]
    %v132 = vld [vmem:[#allocation2 + $0x70] sm:$0xff]
    %v133 = vld [vmem:[#allocation2 + $0x78] sm:$0xff]
    %v134 = vld [vmem:[#allocation2 + $0x80] sm:$0xff]
    %v135 = vld [vmem:[#allocation2 + $0x88] sm:$0xff]
    %v136 = vld [vmem:[#allocation2 + $0x90] sm:$0xff]
    %v137 = vld [vmem:[#allocation2 + $0x98] sm:$0xff]
    %v138 = vld [vmem:[#allocation2 + $0xa0] sm:$0xff]
    %v139 = vld [vmem:[#allocation2 + $0xa8] sm:$0xff]
    %v140 = vld [vmem:[#allocation2 + $0xb0] sm:$0xff]
    %v141 = vld [vmem:[#allocation2 + $0xb8] sm:$0xff]
    %v142 = vld [vmem:[#allocation2 + $0xc0] sm:$0xff]
    %v143 = vld [vmem:[#allocation2 + $0xc8] sm:$0xff]
    %v144 = vld [vmem:[#allocation2 + $0xd0] sm:$0xff]
    %v145 = vld [vmem:[#allocation2 + $0xd8] sm:$0xff]
    %v146 = vld [vmem:[#allocation2 + $0xe0] sm:$0xff]
    %v147 = vld [vmem:[#allocation2 + $0xe8] sm:$0xff]
    %v148 = vld [vmem:[#allocation2 + $0xf0] sm:$0xff]
    %v149 = vld [vmem:[#allocation2 + $0xf8] sm:$0xff]
    %151 = vset.pattern.permute.xlu0 0
    %152 = vperm.xlu0 %151, %v118
    %v153 = vpop.permute.xlu0 %152
    %156 = vset.pattern.permute.xlu0 0
    %157 = vperm.xlu0 %156, %v119
    %v158 = vpop.permute.xlu0 %157
    %161 = vset.pattern.permute.xlu0 0
    %162 = vperm.xlu0 %161, %v120
    %v163 = vpop.permute.xlu0 %162
    %166 = vset.pattern.permute.xlu0 0
    %167 = vperm.xlu0 %166, %v121
    %v168 = vpop.permute.xlu0 %167
    %171 = vset.pattern.permute.xlu0 0
    %172 = vperm.xlu0 %171, %v122
    %v173 = vpop.permute.xlu0 %172
    %176 = vset.pattern.permute.xlu0 0
    %177 = vperm.xlu0 %176, %v123
    %v178 = vpop.permute.xlu0 %177
    %181 = vset.pattern.permute.xlu0 0
    %182 = vperm.xlu0 %181, %v124
    %v183 = vpop.permute.xlu0 %182
    %186 = vset.pattern.permute.xlu0 0
    %187 = vperm.xlu0 %186, %v125
    %v188 = vpop.permute.xlu0 %187
    %191 = vset.pattern.permute.xlu0 0
    %192 = vperm.xlu0 %191, %v126
    %v193 = vpop.permute.xlu0 %192
    %196 = vset.pattern.permute.xlu0 0
    %197 = vperm.xlu0 %196, %v127
    %v198 = vpop.permute.xlu0 %197
    %201 = vset.pattern.permute.xlu0 0
    %202 = vperm.xlu0 %201, %v128
    %v203 = vpop.permute.xlu0 %202
    %206 = vset.pattern.permute.xlu0 0
    %207 = vperm.xlu0 %206, %v129
    %v208 = vpop.permute.xlu0 %207
    %211 = vset.pattern.permute.xlu0 0
    %212 = vperm.xlu0 %211, %v130
    %v213 = vpop.permute.xlu0 %212
    %216 = vset.pattern.permute.xlu0 0
    %217 = vperm.xlu0 %216, %v131
    %v218 = vpop.permute.xlu0 %217
    %221 = vset.pattern.permute.xlu0 0
    %222 = vperm.xlu0 %221, %v132
    %v223 = vpop.permute.xlu0 %222
    %226 = vset.pattern.permute.xlu0 0
    %227 = vperm.xlu0 %226, %v133
    %v228 = vpop.permute.xlu0 %227
    %231 = vset.pattern.permute.xlu0 0
    %232 = vperm.xlu0 %231, %v134
    %v233 = vpop.permute.xlu0 %232
    %236 = vset.pattern.permute.xlu0 0
    %237 = vperm.xlu0 %236, %v135
    %v238 = vpop.permute.xlu0 %237
    %241 = vset.pattern.permute.xlu0 0
    %242 = vperm.xlu0 %241, %v136
    %v243 = vpop.permute.xlu0 %242
    %246 = vset.pattern.permute.xlu0 0
    %247 = vperm.xlu0 %246, %v137
    %v248 = vpop.permute.xlu0 %247
    %251 = vset.pattern.permute.xlu0 0
    %252 = vperm.xlu0 %251, %v138
    %v253 = vpop.permute.xlu0 %252
    %256 = vset.pattern.permute.xlu0 0
    %257 = vperm.xlu0 %256, %v139
    %v258 = vpop.permute.xlu0 %257
    %261 = vset.pattern.permute.xlu0 0
    %262 = vperm.xlu0 %261, %v140
    %v263 = vpop.permute.xlu0 %262
    %266 = vset.pattern.permute.xlu0 0
    %267 = vperm.xlu0 %266, %v141
    %v268 = vpop.permute.xlu0 %267
    %271 = vset.pattern.permute.xlu0 0
    %272 = vperm.xlu0 %271, %v142
    %v273 = vpop.permute.xlu0 %272
    %276 = vset.pattern.permute.xlu0 0
    %277 = vperm.xlu0 %276, %v143
    %v278 = vpop.permute.xlu0 %277
    %281 = vset.pattern.permute.xlu0 0
    %282 = vperm.xlu0 %281, %v144
    %v283 = vpop.permute.xlu0 %282
    %286 = vset.pattern.permute.xlu0 0
    %287 = vperm.xlu0 %286, %v145
    %v288 = vpop.permute.xlu0 %287
    %291 = vset.pattern.permute.xlu0 0
    %292 = vperm.xlu0 %291, %v146
    %v293 = vpop.permute.xlu0 %292
    %296 = vset.pattern.permute.xlu0 0
    %297 = vperm.xlu0 %296, %v147
    %v298 = vpop.permute.xlu0 %297
    %301 = vset.pattern.permute.xlu0 0
    %302 = vperm.xlu0 %301, %v148
    %v303 = vpop.permute.xlu0 %302
    %306 = vset.pattern.permute.xlu0 0
    %307 = vperm.xlu0 %306, %v149
    %v308 = vpop.permute.xlu0 %307
    %v310 = vmul.f32 %v54, %v153
    %v311 = vmul.f32 %v55, %v153
    %v312 = vmul.f32 %v56, %v158
    %v313 = vmul.f32 %v57, %v158
    %v314 = vmul.f32 %v58, %v163
    %v315 = vmul.f32 %v59, %v163
    %v316 = vmul.f32 %v60, %v168
    %v317 = vmul.f32 %v61, %v168
    %v318 = vmul.f32 %v62, %v173
    %v319 = vmul.f32 %v63, %v173
    %v320 = vmul.f32 %v64, %v178
    %v321 = vmul.f32 %v65, %v178
    %v322 = vmul.f32 %v66, %v183
    %v323 = vmul.f32 %v67, %v183
    %v324 = vmul.f32 %v68, %v188
    %v325 = vmul.f32 %v69, %v188
    %v326 = vmul.f32 %v70, %v193
    %v327 = vmul.f32 %v71, %v193
    %v328 = vmul.f32 %v72, %v198
    %v329 = vmul.f32 %v73, %v198
    %v330 = vmul.f32 %v74, %v203
    %v331 = vmul.f32 %v75, %v203
    %v332 = vmul.f32 %v76, %v208
    %v333 = vmul.f32 %v77, %v208
    %v334 = vmul.f32 %v78, %v213
    %v335 = vmul.f32 %v79, %v213
    %v336 = vmul.f32 %v80, %v218
    %v337 = vmul.f32 %v81, %v218
    %v338 = vmul.f32 %v82, %v223
    %v339 = vmul.f32 %v83, %v223
    %v340 = vmul.f32 %v84, %v228
    %v341 = vmul.f32 %v85, %v228
    %v342 = vmul.f32 %v86, %v233
    %v343 = vmul.f32 %v87, %v233
    %v344 = vmul.f32 %v88, %v238
    %v345 = vmul.f32 %v89, %v238
    %v346 = vmul.f32 %v90, %v243
    %v347 = vmul.f32 %v91, %v243
    %v348 = vmul.f32 %v92, %v248
    %v349 = vmul.f32 %v93, %v248
    %v350 = vmul.f32 %v94, %v253
    %v351 = vmul.f32 %v95, %v253
    %v352 = vmul.f32 %v96, %v258
    %v353 = vmul.f32 %v97, %v258
    %v354 = vmul.f32 %v98, %v263
    %v355 = vmul.f32 %v99, %v263
    %v356 = vmul.f32 %v100, %v268
    %v357 = vmul.f32 %v101, %v268
    %v358 = vmul.f32 %v102, %v273
    %v359 = vmul.f32 %v103, %v273
    %v360 = vmul.f32 %v104, %v278
    %v361 = vmul.f32 %v105, %v278
    %v362 = vmul.f32 %v106, %v283
    %v363 = vmul.f32 %v107, %v283
    %v364 = vmul.f32 %v108, %v288
    %v365 = vmul.f32 %v109, %v288
    %v366 = vmul.f32 %v110, %v293
    %v367 = vmul.f32 %v111, %v293
    %v368 = vmul.f32 %v112, %v298
    %v369 = vmul.f32 %v113, %v298
    %v370 = vmul.f32 %v114, %v303
    %v371 = vmul.f32 %v115, %v303
    %v372 = vmul.f32 %v116, %v308
    %v373 = vmul.f32 %v117, %v308
    %v374 = vld [vmem:[#allocation5] sm:$0x3]
    %v376 = vlaneseq
    %v377 = vshrl.u32 %v376, 7
    %v378 = vsub.s32 0, %v377
    %v379 = vrot.slane %v374, %v378
    %v380 = vlaneseq
    %v381 = vshrl.u32 %v380, 7
    %v382 = vsub.s32 1, %v381
    %v383 = vrot.slane %v374, %v382
    %v386 = vmul.f32 %v310, %v379
    %v387 = vmul.f32 %v311, %v383
    %v388 = vmul.f32 %v312, %v379
    %v389 = vmul.f32 %v313, %v383
    %v390 = vmul.f32 %v314, %v379
    %v391 = vmul.f32 %v315, %v383
    %v392 = vmul.f32 %v316, %v379
    %v393 = vmul.f32 %v317, %v383
    %v394 = vmul.f32 %v318, %v379
    %v395 = vmul.f32 %v319, %v383
    %v396 = vmul.f32 %v320, %v379
    %v397 = vmul.f32 %v321, %v383
    %v398 = vmul.f32 %v322, %v379
    %v399 = vmul.f32 %v323, %v383
    %v400 = vmul.f32 %v324, %v379
    %v401 = vmul.f32 %v325, %v383
    %v402 = vmul.f32 %v326, %v379
    %v403 = vmul.f32 %v327, %v383
    %v404 = vmul.f32 %v328, %v379
    %v405 = vmul.f32 %v329, %v383
    %v406 = vmul.f32 %v330, %v379
    %v407 = vmul.f32 %v331, %v383
    %v408 = vmul.f32 %v332, %v379
    %v409 = vmul.f32 %v333, %v383
    %v410 = vmul.f32 %v334, %v379
    %v411 = vmul.f32 %v335, %v383
    %v412 = vmul.f32 %v336, %v379
    %v413 = vmul.f32 %v337, %v383
    %v414 = vmul.f32 %v338, %v379
    %v415 = vmul.f32 %v339, %v383
    %v416 = vmul.f32 %v340, %v379
    %v417 = vmul.f32 %v341, %v383
    %v418 = vmul.f32 %v342, %v379
    %v419 = vmul.f32 %v343, %v383
    %v420 = vmul.f32 %v344, %v379
    %v421 = vmul.f32 %v345, %v383
    %v422 = vmul.f32 %v346, %v379
    %v423 = vmul.f32 %v347, %v383
    %v424 = vmul.f32 %v348, %v379
    %v425 = vmul.f32 %v349, %v383
    %v426 = vmul.f32 %v350, %v379
    %v427 = vmul.f32 %v351, %v383
    %v428 = vmul.f32 %v352, %v379
    %v429 = vmul.f32 %v353, %v383
    %v430 = vmul.f32 %v354, %v379
    %v431 = vmul.f32 %v355, %v383
    %v432 = vmul.f32 %v356, %v379
    %v433 = vmul.f32 %v357, %v383
    %v434 = vmul.f32 %v358, %v379
    %v435 = vmul.f32 %v359, %v383
    %v436 = vmul.f32 %v360, %v379
    %v437 = vmul.f32 %v361, %v383
    %v438 = vmul.f32 %v362, %v379
    %v439 = vmul.f32 %v363, %v383
    %v440 = vmul.f32 %v364, %v379
    %v441 = vmul.f32 %v365, %v383
    %v442 = vmul.f32 %v366, %v379
    %v443 = vmul.f32 %v367, %v383
    %v444 = vmul.f32 %v368, %v379
    %v445 = vmul.f32 %v369, %v383
    %v446 = vmul.f32 %v370, %v379
    %v447 = vmul.f32 %v371, %v383
    %v448 = vmul.f32 %v372, %v379
    %v449 = vmul.f32 %v373, %v383
    %v450 = vmax.f32 %v386, 0.001
    %v451 = vmax.f32 %v387, 0.001
    %v452 = vmax.f32 %v388, 0.001
    %v453 = vmax.f32 %v389, 0.001
    %v454 = vmax.f32 %v390, 0.001
    %v455 = vmax.f32 %v391, 0.001
    %v456 = vmax.f32 %v392, 0.001
    %v457 = vmax.f32 %v393, 0.001
    %v458 = vmax.f32 %v394, 0.001
    %v459 = vmax.f32 %v395, 0.001
    %v460 = vmax.f32 %v396, 0.001
    %v461 = vmax.f32 %v397, 0.001
    %v462 = vmax.f32 %v398, 0.001
    %v463 = vmax.f32 %v399, 0.001
    %v464 = vmax.f32 %v400, 0.001
    %v465 = vmax.f32 %v401, 0.001
    %v466 = vmax.f32 %v402, 0.001
    %v467 = vmax.f32 %v403, 0.001
    %v468 = vmax.f32 %v404, 0.001
    %v469 = vmax.f32 %v405, 0.001
    %v470 = vmax.f32 %v406, 0.001
    %v471 = vmax.f32 %v407, 0.001
    %v472 = vmax.f32 %v408, 0.001
    %v473 = vmax.f32 %v409, 0.001
    %v474 = vmax.f32 %v410, 0.001
    %v475 = vmax.f32 %v411, 0.001
    %v476 = vmax.f32 %v412, 0.001
    %v477 = vmax.f32 %v413, 0.001
    %v478 = vmax.f32 %v414, 0.001
    %v479 = vmax.f32 %v415, 0.001
    %v480 = vmax.f32 %v416, 0.001
    %v481 = vmax.f32 %v417, 0.001
    %v482 = vmax.f32 %v418, 0.001
    %v483 = vmax.f32 %v419, 0.001
    %v484 = vmax.f32 %v420, 0.001
    %v485 = vmax.f32 %v421, 0.001
    %v486 = vmax.f32 %v422, 0.001
    %v487 = vmax.f32 %v423, 0.001
    %v488 = vmax.f32 %v424, 0.001
    %v489 = vmax.f32 %v425, 0.001
    %v490 = vmax.f32 %v426, 0.001
    %v491 = vmax.f32 %v427, 0.001
    %v492 = vmax.f32 %v428, 0.001
    %v493 = vmax.f32 %v429, 0.001
    %v494 = vmax.f32 %v430, 0.001
    %v495 = vmax.f32 %v431, 0.001
    %v496 = vmax.f32 %v432, 0.001
    %v497 = vmax.f32 %v433, 0.001
    %v498 = vmax.f32 %v434, 0.001
    %v499 = vmax.f32 %v435, 0.001
    %v500 = vmax.f32 %v436, 0.001
    %v501 = vmax.f32 %v437, 0.001
    %v502 = vmax.f32 %v438, 0.001
    %v503 = vmax.f32 %v439, 0.001
    %v504 = vmax.f32 %v440, 0.001
    %v505 = vmax.f32 %v441, 0.001
    %v506 = vmax.f32 %v442, 0.001
    %v507 = vmax.f32 %v443, 0.001
    %v508 = vmax.f32 %v444, 0.001
    %v509 = vmax.f32 %v445, 0.001
    %v510 = vmax.f32 %v446, 0.001
    %v511 = vmax.f32 %v447, 0.001
    %v512 = vmax.f32 %v448, 0.001
    %v513 = vmax.f32 %v449, 0.001
    %v514 = vlog2.pop %v450
    %v515 = vmul.f32 %v514, 0.6931472
    %v516 = vlog2.pop %v451
    %v517 = vmul.f32 %v516, 0.6931472
    %v518 = vlog2.pop %v452
    %v519 = vmul.f32 %v518, 0.6931472
    %v520 = vlog2.pop %v453
    %v521 = vmul.f32 %v520, 0.6931472
    %v522 = vlog2.pop %v454
    %v523 = vmul.f32 %v522, 0.6931472
    %v524 = vlog2.pop %v455
    %v525 = vmul.f32 %v524, 0.6931472
    %v526 = vlog2.pop %v456
    %v527 = vmul.f32 %v526, 0.6931472
    %v528 = vlog2.pop %v457
    %v529 = vmul.f32 %v528, 0.6931472
    %v530 = vlog2.pop %v458
    %v531 = vmul.f32 %v530, 0.6931472
    %v532 = vlog2.pop %v459
    %v533 = vmul.f32 %v532, 0.6931472
    %v534 = vlog2.pop %v460
    %v535 = vmul.f32 %v534, 0.6931472
    %v536 = vlog2.pop %v461
    %v537 = vmul.f32 %v536, 0.6931472
    %v538 = vlog2.pop %v462
    %v539 = vmul.f32 %v538, 0.6931472
    %v540 = vlog2.pop %v463
    %v541 = vmul.f32 %v540, 0.6931472
    %v542 = vlog2.pop %v464
    %v543 = vmul.f32 %v542, 0.6931472
    %v544 = vlog2.pop %v465
    %v545 = vmul.f32 %v544, 0.6931472
    %v546 = vlog2.pop %v466
    %v547 = vmul.f32 %v546, 0.6931472
    %v548 = vlog2.pop %v467
    %v549 = vmul.f32 %v548, 0.6931472
    %v550 = vlog2.pop %v468
    %v551 = vmul.f32 %v550, 0.6931472
    %v552 = vlog2.pop %v469
    %v553 = vmul.f32 %v552, 0.6931472
    %v554 = vlog2.pop %v470
    %v555 = vmul.f32 %v554, 0.6931472
    %v556 = vlog2.pop %v471
    %v557 = vmul.f32 %v556, 0.6931472
    %v558 = vlog2.pop %v472
    %v559 = vmul.f32 %v558, 0.6931472
    %v560 = vlog2.pop %v473
    %v561 = vmul.f32 %v560, 0.6931472
    %v562 = vlog2.pop %v474
    %v563 = vmul.f32 %v562, 0.6931472
    %v564 = vlog2.pop %v475
    %v565 = vmul.f32 %v564, 0.6931472
    %v566 = vlog2.pop %v476
    %v567 = vmul.f32 %v566, 0.6931472
    %v568 = vlog2.pop %v477
    %v569 = vmul.f32 %v568, 0.6931472
    %v570 = vlog2.pop %v478
    %v571 = vmul.f32 %v570, 0.6931472
    %v572 = vlog2.pop %v479
    %v573 = vmul.f32 %v572, 0.6931472
    %v574 = vlog2.pop %v480
    %v575 = vmul.f32 %v574, 0.6931472
    %v576 = vlog2.pop %v481
    %v577 = vmul.f32 %v576, 0.6931472
    %v578 = vlog2.pop %v482
    %v579 = vmul.f32 %v578, 0.6931472
    %v580 = vlog2.pop %v483
    %v581 = vmul.f32 %v580, 0.6931472
    %v582 = vlog2.pop %v484
    %v583 = vmul.f32 %v582, 0.6931472
    %v584 = vlog2.pop %v485
    %v585 = vmul.f32 %v584, 0.6931472
    %v586 = vlog2.pop %v486
    %v587 = vmul.f32 %v586, 0.6931472
    %v588 = vlog2.pop %v487
    %v589 = vmul.f32 %v588, 0.6931472
    %v590 = vlog2.pop %v488
    %v591 = vmul.f32 %v590, 0.6931472
    %v592 = vlog2.pop %v489
    %v593 = vmul.f32 %v592, 0.6931472
    %v594 = vlog2.pop %v490
    %v595 = vmul.f32 %v594, 0.6931472
    %v596 = vlog2.pop %v491
    %v597 = vmul.f32 %v596, 0.6931472
    %v598 = vlog2.pop %v492
    %v599 = vmul.f32 %v598, 0.6931472
    %v600 = vlog2.pop %v493
    %v601 = vmul.f32 %v600, 0.6931472
    %v602 = vlog2.pop %v494
    %v603 = vmul.f32 %v602, 0.6931472
    %v604 = vlog2.pop %v495
    %v605 = vmul.f32 %v604, 0.6931472
    %v606 = vlog2.pop %v496
    %v607 = vmul.f32 %v606, 0.6931472
    %v608 = vlog2.pop %v497
    %v609 = vmul.f32 %v608, 0.6931472
    %v610 = vlog2.pop %v498
    %v611 = vmul.f32 %v610, 0.6931472
    %v612 = vlog2.pop %v499
    %v613 = vmul.f32 %v612, 0.6931472
    %v614 = vlog2.pop %v500
    %v615 = vmul.f32 %v614, 0.6931472
    %v616 = vlog2.pop %v501
    %v617 = vmul.f32 %v616, 0.6931472
    %v618 = vlog2.pop %v502
    %v619 = vmul.f32 %v618, 0.6931472
    %v620 = vlog2.pop %v503
    %v621 = vmul.f32 %v620, 0.6931472
    %v622 = vlog2.pop %v504
    %v623 = vmul.f32 %v622, 0.6931472
    %v624 = vlog2.pop %v505
    %v625 = vmul.f32 %v624, 0.6931472
    %v626 = vlog2.pop %v506
    %v627 = vmul.f32 %v626, 0.6931472
    %v628 = vlog2.pop %v507
    %v629 = vmul.f32 %v628, 0.6931472
    %v630 = vlog2.pop %v508
    %v631 = vmul.f32 %v630, 0.6931472
    %v632 = vlog2.pop %v509
    %v633 = vmul.f32 %v632, 0.6931472
    %v634 = vlog2.pop %v510
    %v635 = vmul.f32 %v634, 0.6931472
    %v636 = vlog2.pop %v511
    %v637 = vmul.f32 %v636, 0.6931472
    %v638 = vlog2.pop %v512
    %v639 = vmul.f32 %v638, 0.6931472
    %v640 = vlog2.pop %v513
    %v641 = vmul.f32 %v640, 0.6931472
    %642 = vst [vmem:[#allocation8] sm:$0xff] %v515
    %643 = vst [vmem:[#allocation8 + $0x8] sm:$0xff] %v517
    %644 = vst [vmem:[#allocation8 + $0x10] sm:$0xff] %v519
    %645 = vst [vmem:[#allocation8 + $0x18] sm:$0xff] %v521
    %646 = vst [vmem:[#allocation8 + $0x20] sm:$0xff] %v523
    %647 = vst [vmem:[#allocation8 + $0x28] sm:$0xff] %v525
    %648 = vst [vmem:[#allocation8 + $0x30] sm:$0xff] %v527
    %649 = vst [vmem:[#allocation8 + $0x38] sm:$0xff] %v529
    %650 = vst [vmem:[#allocation8 + $0x40] sm:$0xff] %v531
    %651 = vst [vmem:[#allocation8 + $0x48] sm:$0xff] %v533
    %652 = vst [vmem:[#allocation8 + $0x50] sm:$0xff] %v535
    %653 = vst [vmem:[#allocation8 + $0x58] sm:$0xff] %v537
    %654 = vst [vmem:[#allocation8 + $0x60] sm:$0xff] %v539
    %655 = vst [vmem:[#allocation8 + $0x68] sm:$0xff] %v541
    %656 = vst [vmem:[#allocation8 + $0x70] sm:$0xff] %v543
    %657 = vst [vmem:[#allocation8 + $0x78] sm:$0xff] %v545
    %658 = vst [vmem:[#allocation8 + $0x80] sm:$0xff] %v547
    %659 = vst [vmem:[#allocation8 + $0x88] sm:$0xff] %v549
    %660 = vst [vmem:[#allocation8 + $0x90] sm:$0xff] %v551
    %661 = vst [vmem:[#allocation8 + $0x98] sm:$0xff] %v553
    %662 = vst [vmem:[#allocation8 + $0xa0] sm:$0xff] %v555
    %663 = vst [vmem:[#allocation8 + $0xa8] sm:$0xff] %v557
    %664 = vst [vmem:[#allocation8 + $0xb0] sm:$0xff] %v559
    %665 = vst [vmem:[#allocation8 + $0xb8] sm:$0xff] %v561
    %666 = vst [vmem:[#allocation8 + $0xc0] sm:$0xff] %v563
    %667 = vst [vmem:[#allocation8 + $0xc8] sm:$0xff] %v565
    %668 = vst [vmem:[#allocation8 + $0xd0] sm:$0xff] %v567
    %669 = vst [vmem:[#allocation8 + $0xd8] sm:$0xff] %v569
    %670 = vst [vmem:[#allocation8 + $0xe0] sm:$0xff] %v571
    %671 = vst [vmem:[#allocation8 + $0xe8] sm:$0xff] %v573
    %672 = vst [vmem:[#allocation8 + $0xf0] sm:$0xff] %v575
    %673 = vst [vmem:[#allocation8 + $0xf8] sm:$0xff] %v577
    %674 = vst [vmem:[#allocation8 + $0x100] sm:$0xff] %v579
    %675 = vst [vmem:[#allocation8 + $0x108] sm:$0xff] %v581
    %676 = vst [vmem:[#allocation8 + $0x110] sm:$0xff] %v583
    %677 = vst [vmem:[#allocation8 + $0x118] sm:$0xff] %v585
    %678 = vst [vmem:[#allocation8 + $0x120] sm:$0xff] %v587
    %679 = vst [vmem:[#allocation8 + $0x128] sm:$0xff] %v589
    %680 = vst [vmem:[#allocation8 + $0x130] sm:$0xff] %v591
    %681 = vst [vmem:[#allocation8 + $0x138] sm:$0xff] %v593
    %682 = vst [vmem:[#allocation8 + $0x140] sm:$0xff] %v595
    %683 = vst [vmem:[#allocation8 + $0x148] sm:$0xff] %v597
    %684 = vst [vmem:[#allocation8 + $0x150] sm:$0xff] %v599
    %685 = vst [vmem:[#allocation8 + $0x158] sm:$0xff] %v601
    %686 = vst [vmem:[#allocation8 + $0x160] sm:$0xff] %v603
    %687 = vst [vmem:[#allocation8 + $0x168] sm:$0xff] %v605
    %688 = vst [vmem:[#allocation8 + $0x170] sm:$0xff] %v607
    %689 = vst [vmem:[#allocation8 + $0x178] sm:$0xff] %v609
    %690 = vst [vmem:[#allocation8 + $0x180] sm:$0xff] %v611
    %691 = vst [vmem:[#allocation8 + $0x188] sm:$0xff] %v613
    %692 = vst [vmem:[#allocation8 + $0x190] sm:$0xff] %v615
    %693 = vst [vmem:[#allocation8 + $0x198] sm:$0xff] %v617
    %694 = vst [vmem:[#allocation8 + $0x1a0] sm:$0xff] %v619
    %695 = vst [vmem:[#allocation8 + $0x1a8] sm:$0xff] %v621
    %696 = vst [vmem:[#allocation8 + $0x1b0] sm:$0xff] %v623
    %697 = vst [vmem:[#allocation8 + $0x1b8] sm:$0xff] %v625
    %698 = vst [vmem:[#allocation8 + $0x1c0] sm:$0xff] %v627
    %699 = vst [vmem:[#allocation8 + $0x1c8] sm:$0xff] %v629
    %700 = vst [vmem:[#allocation8 + $0x1d0] sm:$0xff] %v631
    %701 = vst [vmem:[#allocation8 + $0x1d8] sm:$0xff] %v633
    %702 = vst [vmem:[#allocation8 + $0x1e0] sm:$0xff] %v635
    %703 = vst [vmem:[#allocation8 + $0x1e8] sm:$0xff] %v637
    %704 = vst [vmem:[#allocation8 + $0x1f0] sm:$0xff] %v639
    %705 = vst [vmem:[#allocation8 + $0x1f8] sm:$0xff] %v641
    // Predicated region
    $region26: #{linemf_forward.1} parent=1 // pred_check
      _
    $region27: #{linemf_forward.1} parent=1 // pred_check_branch
      %707 = sbr.rel (0) target = $region29
    $region28: #{linemf_forward.1} parent=1 // pred_region
      %s709 = ssub.s32 8192, 8192
      %710 = vsyncadd [#allocation4], %s709
      %s711 = sshll.u32 [#allocation8], 4
      %s712 = int_to_ptr.vmem [resolvable:$true] %s711
      %717 = dma.vmem_to_hbm [thread:$0]  %s712, 8192, %s3, [#allocation4], 256, 256, 16
    $region29: #{linemf_forward.1} parent=1 // pred_fallthru
      _
    // Predicated region
    $region30: #{linemf_forward.1} parent=1 // pred_check
      _
    $region31: #{linemf_forward.1} parent=1 // pred_check_branch
      %719 = sbr.rel (0) target = $region33
    $region32: #{linemf_forward.1} parent=1 // pred_region
      %720 = dma.done [#allocation4], 8192
    $region33: #{linemf_forward.1} parent=1 // pred_fallthru
      _
    %721 = vsyncpa [#allocation3], 1
    %722 = vsyncpa [#allocation6], 1
    %723 = vsyncpa [#allocation4], 1

</llo_original>
